<compile_context>
chip_gen: v5e
topology: v5e:2x2
jax: 0.10.0
libtpu: 0.0.40
codegen_flags: <defaults>
</compile_context>

<pallas_src>
import jax
import jax.numpy as jnp
from jax import lax
from jax.experimental import pallas as pl
from jax.experimental.pallas import tpu as pltpu


def _round_up(x, m):
    return (x + m - 1) // m * m


def _largest_divisor_tile(total, unit, cap):
    """Largest multiple of `unit` that divides `total` and is <= cap."""
    best = unit
    g = unit
    while g <= min(total, cap):
        if total % g == 0:
            best = g
        g += unit
    return best


def _vmem_capacity_bytes():
    try:
        info = pltpu.get_tpu_info()
        cap = getattr(info, "vmem_capacity_bytes", None)
        if cap:
            return int(cap)
    except Exception:
        pass
    return 64 << 20  # conservative fallback (v7x per-TC VMEM)


def _choose_tiles(B, N, M, d_pad, a_bytes, x_bytes, out_bytes, budget):
    """Pick (tb, tn, td) so double-buffered tiles + accumulators fit `budget`."""
    m_est = _round_up(M, 16)

    # Feature (lane) tile: largest multiple-of-128 divisor of d_pad, <= 512.
    td = _largest_divisor_tile(d_pad, 128, 512)

    # Batch tile: amortize the ~0.35us/step grid overhead, but keep >= 2 batch
    # blocks whenever B >= 2 so both v7x TensorCores get work.
    tb = max(1, min(B, 8))
    if B >= 2:
        tb = min(tb, max(1, B // 2))

    # Contraction tile: multiple of 256 (128 minimum) -> native MXU passes and
    # lane-dense A DMA after the transpose.
    tn = 128 if N <= 128 else min(_round_up(N, 256), 2048)

    def vmem_bytes(tb_, tn_, td_):
        a_t = tb_ * m_est * tn_ * a_bytes
        x_t = tb_ * tn_ * td_ * x_bytes
        o_t = tb_ * m_est * td_ * out_bytes
        acc = tb_ * m_est * td_ * 4
        deg = tb_ * m_est * 128 * 4
        return 2 * (a_t + x_t + o_t) + acc + deg  # in/out double-buffered

    while vmem_bytes(tb, tn, td) > budget and tn > 256:
        tn -= 256
    if vmem_bytes(tb, tn, td) > budget and tn > 128:
        tn = 128
    while vmem_bytes(tb, tn, td) > budget and tb > 1:
        tb = max(1, tb // 2)
    while vmem_bytes(tb, tn, td) > budget and td > 128:
        td = _largest_divisor_tile(td, 128, td - 128)
    return tb, tn, td


def _inter_edge_mean_kernel(a_ref, x_ref, o_ref, acc_ref, deg_ref):
    """One grid step (b_block, d_block, k):
         a_ref   (tb, M,  tn)  transposed adjacency tile (bf16, lane = N)
         x_ref   (tb, tn, td)  feature tile (bf16)
         o_ref   (tb, M,  td)  output block, resident across the k axis
         acc_ref (tb, M,  td)  f32 matmul accumulator
         deg_ref (tb, M,  1)   f32 degree accumulator
    """
    k = pl.program_id(2)

    @pl.when(k == 0)
    def _():
        acc_ref[...] = jnp.zeros_like(acc_ref)
        deg_ref[...] = jnp.zeros_like(deg_ref)

    a = a_ref[...]                                   # (tb, M, tn) bf16
    x = x_ref[...]                                   # (tb, tn, td) bf16

    # Batched (M,K)x(K,D) contraction, bf16 inputs, f32 accumulation (MXU).
    acc_ref[...] += lax.dot_general(
        a, x,
        dimension_numbers=(((2,), (1,)), ((0,), (0,))),
        preferred_element_type=jnp.float32,
    )
    # Degree = sum over N of the adjacency tile (XLU lane reduce; free filler).
    deg_ref[...] += jnp.sum(a.astype(jnp.float32), axis=-1, keepdims=True)

    @pl.when(k == pl.num_programs(2) - 1)
    def _():
        # Exact divide, once per output block.  No zero-degree guard, matching
        # the PyTorch mean path (zero-degree columns -> inf/nan).
        o_ref[...] = (acc_ref[...] / deg_ref[...]).astype(o_ref.dtype)


def _pad_to(arr, shape):
    pads = [(0, t - s) for s, t in zip(arr.shape, shape)]
    if any(p for _, p in pads):
        return jnp.pad(arr, pads)
    return arr


def inter_edge_aggregate_mean(X, A, *, compute_dtype=jnp.bfloat16):
    """InterEdgeAggregate(aggregate_type='mean') forward.

    X: (B, N, D), A: (B, N, M) -> Xe: (B, M, D).
    compute_dtype=bfloat16 is exact for a 0/1 adjacency and halves HBM traffic;
    pass jnp.float32 for general-valued A or bitwise closeness to PyTorch.
    """
    B, N, D = X.shape
    _, _, M = A.shape
    out_dtype = X.dtype

    a_bytes = jnp.dtype(compute_dtype).itemsize
    x_bytes = jnp.dtype(compute_dtype).itemsize
    out_bytes = jnp.dtype(out_dtype).itemsize

    d_pad = _round_up(D, 128)

    cap = _vmem_capacity_bytes()
    budget = max(12 << 20, min(cap // 3, 56 << 20))
    vmem_limit = max(32 << 20, min((cap * 3) // 4, 96 << 20))

    tb, tn, td = _choose_tiles(B, N, M, d_pad, a_bytes, x_bytes, out_bytes, budget)

    n_pad = _round_up(N, tn)
    b_pad = _round_up(B, tb)
    d_blocks = d_pad // td

    # A: cast + transpose to (B, M, N) + zero-pad in one fused pass.  Zero-padded
    # N entries contribute nothing to the matmul or the degree, so X's padding
    # values are irrelevant (zeros via jnp.pad).
    a_t = _pad_to(jnp.swapaxes(A, -1, -2).astype(compute_dtype), (b_pad, M, n_pad))
    x_p = _pad_to(X.astype(compute_dtype), (b_pad, n_pad, d_pad))

    grid = (b_pad // tb, d_blocks, n_pad // tn)

    cost = pl.CostEstimate(
        flops=2 * b_pad * M * n_pad * d_pad,
        transcendentals=0,
        bytes_accessed=int(a_t.size) * a_bytes * d_blocks
        + int(x_p.size) * x_bytes
        + b_pad * M * d_pad * out_bytes,
    )

    out = pl.pallas_call(
        _inter_edge_mean_kernel,
        out_shape=jax.ShapeDtypeStruct((b_pad, M, d_pad), out_dtype),
        grid_spec=pltpu.PrefetchScalarGridSpec(
            num_scalar_prefetch=0,
            grid=grid,
            in_specs=[
                # A^T tile: lane-dense along N (the contraction axis).
                pl.BlockSpec((tb, M, tn), lambda b, d, k: (b, 0, k)),
                # X tile.
                pl.BlockSpec((tb, tn, td), lambda b, d, k: (b, k, d)),
            ],
            out_specs=pl.BlockSpec((tb, M, td), lambda b, d, k: (b, 0, d)),
            scratch_shapes=[
                pltpu.VMEM((tb, M, td), jnp.float32),  # matmul accumulator
                pltpu.VMEM((tb, M, 1), jnp.float32),   # degree accumulator
            ],
        ),
        compiler_params=pltpu.CompilerParams(
            dimension_semantics=("parallel", "parallel", "arbitrary"),
            vmem_limit_bytes=int(vmem_limit),
        ),
        cost_estimate=cost,
    )(a_t, x_p)

    # Strip batch / feature padding.
    return out[:B, :, :D].astype(out_dtype)


def _reference(X, A):
    # Pure-JAX reference mirroring the PyTorch mean path.
    At = jnp.swapaxes(A, -1, -2)                 # (B, M, N)
    degree = jnp.sum(A, axis=1)[..., None]       # (B, M, 1)
    return jnp.matmul(At, X) / degree            # (B, M, D)


if __name__ == "__main__":
    # Small shapes: batch=2, nodes N=16, edges M=8, node_dim D=32.
    B, N, M, D = 2, 16, 8, 32

    key = jax.random.PRNGKey(0)
    kx, ka = jax.random.split(key)

    X = jax.random.normal(kx, (B, N, D), dtype=jnp.float32)
    # Binary adjacency; guarantee each edge column has at least one incident
    # node so degrees are nonzero (the PyTorch mean path has no zero guard).
    A = (jax.random.uniform(ka, (B, N, M)) > 0.5).astype(jnp.float32)
    A = A.at[:, 0, :].set(1.0)

    Xe = jax.block_until_ready(inter_edge_aggregate_mean(X, A))

    ref = _reference(X, A)
    assert Xe.shape == (B, M, D)
    # Tolerance covers the bf16 MXU inputs (f32 accumulation, exact divide);
    # degrees are small integers, exact in bf16.
    assert jnp.allclose(Xe, ref, atol=3e-2, rtol=3e-2), "mismatch vs reference"

    print("KERNEL_OK")
</pallas_src>

<mosaic_0001>
module attributes {stable_mosaic.version = 11 : i64} {
  func.func @_inter_edge_mean_kernel(%arg0: i32, %arg1: i32, %arg2: i32, %arg3: memref<1x8x128xbf16, #tpu.memory_space<vmem>>, %arg4: memref<1x128x128xbf16, #tpu.memory_space<vmem>>, %arg5: memref<1x8x128xf32, #tpu.memory_space<vmem>>, %arg6: memref<1x8x128xf32, #tpu.memory_space<vmem>>, %arg7: memref<1x8x1xf32, #tpu.memory_space<vmem>>) attributes {dimension_semantics = [#tpu.dimension_semantics<parallel>, #tpu.dimension_semantics<parallel>, #tpu.dimension_semantics<arbitrary>], iteration_bounds = array<i64: 2, 1, 1>, scalar_prefetch = 0 : i64, scratch_operands = 2 : i64, tpu.core_type = #tpu.core_type<tc>, window_params = [{transform_indices = @transform_0, window_bounds = array<i64: 1, 8, 128>}, {transform_indices = @transform_1, window_bounds = array<i64: 1, 128, 128>}, {transform_indices = @transform_2, window_bounds = array<i64: 1, 8, 128>}]} {
    %c0_i32 = arith.constant 0 : i32
    %0 = arith.cmpi eq, %arg2, %c0_i32 : i32
    %1 = arith.extui %0 : i1 to i32
    %c0_i32_0 = arith.constant 0 : i32
    %2 = arith.cmpi ne, %1, %c0_i32_0 : i32
    scf.if %2 {
      %cst_21 = arith.constant 0.000000e+00 : f32
      %18 = vector.broadcast %cst_21 : f32 to vector<1x8x128xf32>
      %c0_22 = arith.constant 0 : index
      %c0_23 = arith.constant 0 : index
      %c0_24 = arith.constant 0 : index
      %19 = vector.load %arg6[%c0_22, %c0_23, %c0_24] : memref<1x8x128xf32, #tpu.memory_space<vmem>>, vector<1x8x128xf32>
      tpu.vector_store %arg6[%c0_22, %c0_23, %c0_24], %18 {strides = array<i32>} : memref<1x8x128xf32, #tpu.memory_space<vmem>>, vector<1x8x128xf32>,
      %cst_25 = arith.constant 0.000000e+00 : f32
      %20 = vector.broadcast %cst_25 : f32 to vector<1x8x1xf32>
      %c0_26 = arith.constant 0 : index
      %c0_27 = arith.constant 0 : index
      %c0_28 = arith.constant 0 : index
      %21 = vector.load %arg7[%c0_26, %c0_27, %c0_28] : memref<1x8x1xf32, #tpu.memory_space<vmem>>, vector<1x8x1xf32>
      tpu.vector_store %arg7[%c0_26, %c0_27, %c0_28], %20 {strides = array<i32>} : memref<1x8x1xf32, #tpu.memory_space<vmem>>, vector<1x8x1xf32>,
    } else {
    }
    %c0 = arith.constant 0 : index
    %c0_1 = arith.constant 0 : index
    %c0_2 = arith.constant 0 : index
    %3 = vector.load %arg3[%c0, %c0_1, %c0_2] : memref<1x8x128xbf16, #tpu.memory_space<vmem>>, vector<1x8x128xbf16>
    %c0_3 = arith.constant 0 : index
    %c0_4 = arith.constant 0 : index
    %c0_5 = arith.constant 0 : index
    %4 = vector.load %arg4[%c0_3, %c0_4, %c0_5] : memref<1x128x128xbf16, #tpu.memory_space<vmem>>, vector<1x128x128xbf16>
    %c0_6 = arith.constant 0 : index
    %c0_7 = arith.constant 0 : index
    %c0_8 = arith.constant 0 : index
    %5 = vector.load %arg6[%c0_6, %c0_7, %c0_8] : memref<1x8x128xf32, #tpu.memory_space<vmem>>, vector<1x8x128xf32>
    %cst = arith.constant dense<0.000000e+00> : vector<1x8x128xf32>
    %6 = tpu.matmul %3, %4, %cst {dimension_numbers = #tpu.dot_dimension_numbers<[2], [1], [1], [2], [0, 0, 0, 1, 1, 2], [0], [0]>} : vector<1x8x128xbf16>, vector<1x128x128xbf16>, vector<1x8x128xf32> -> vector<1x8x128xf32>
    %7 = arith.addf %5, %6 : vector<1x8x128xf32>
    %c0_9 = arith.constant 0 : index
    %c0_10 = arith.constant 0 : index
    %c0_11 = arith.constant 0 : index
    %8 = vector.load %arg6[%c0_9, %c0_10, %c0_11] : memref<1x8x128xf32, #tpu.memory_space<vmem>>, vector<1x8x128xf32>
    tpu.vector_store %arg6[%c0_9, %c0_10, %c0_11], %7 {strides = array<i32>} : memref<1x8x128xf32, #tpu.memory_space<vmem>>, vector<1x8x128xf32>,
    %c0_12 = arith.constant 0 : index
    %c0_13 = arith.constant 0 : index
    %c0_14 = arith.constant 0 : index
    %9 = vector.load %arg7[%c0_12, %c0_13, %c0_14] : memref<1x8x1xf32, #tpu.memory_space<vmem>>, vector<1x8x1xf32>
    %10 = arith.extf %3 : vector<1x8x128xbf16> to vector<1x8x128xf32>
    %cst_15 = arith.constant dense<0.000000e+00> : vector<1x8xf32>
    %11 = vector.multi_reduction <add>, %10, %cst_15 [2] : vector<1x8x128xf32> to vector<1x8xf32>
    %12 = vector.shape_cast %11 : vector<1x8xf32> to vector<1x8x1xf32>
    %13 = arith.addf %9, %12 : vector<1x8x1xf32>
    %c0_16 = arith.constant 0 : index
    %c0_17 = arith.constant 0 : index
    %c0_18 = arith.constant 0 : index
    %14 = vector.load %arg7[%c0_16, %c0_17, %c0_18] : memref<1x8x1xf32, #tpu.memory_space<vmem>>, vector<1x8x1xf32>
    tpu.vector_store %arg7[%c0_16, %c0_17, %c0_18], %13 {strides = array<i32>} : memref<1x8x1xf32, #tpu.memory_space<vmem>>, vector<1x8x1xf32>,
    %c0_i32_19 = arith.constant 0 : i32
    %15 = arith.cmpi eq, %arg2, %c0_i32_19 : i32
    %16 = arith.extui %15 : i1 to i32
    %c0_i32_20 = arith.constant 0 : i32
    %17 = arith.cmpi ne, %16, %c0_i32_20 : i32
    scf.if %17 {
      %c0_21 = arith.constant 0 : index
      %c0_22 = arith.constant 0 : index
      %c0_23 = arith.constant 0 : index
      %18 = vector.load %arg6[%c0_21, %c0_22, %c0_23] : memref<1x8x128xf32, #tpu.memory_space<vmem>>, vector<1x8x128xf32>
      %c0_24 = arith.constant 0 : index
      %c0_25 = arith.constant 0 : index
      %c0_26 = arith.constant 0 : index
      %19 = vector.load %arg7[%c0_24, %c0_25, %c0_26] : memref<1x8x1xf32, #tpu.memory_space<vmem>>, vector<1x8x1xf32>
      %20 = vector.broadcast %19 : vector<1x8x1xf32> to vector<1x8x128xf32>
      %21 = arith.divf %18, %20 : vector<1x8x128xf32>
      %c0_27 = arith.constant 0 : index
      %c0_28 = arith.constant 0 : index
      %c0_29 = arith.constant 0 : index
      %22 = vector.load %arg5[%c0_27, %c0_28, %c0_29] : memref<1x8x128xf32, #tpu.memory_space<vmem>>, vector<1x8x128xf32>
      tpu.vector_store %arg5[%c0_27, %c0_28, %c0_29], %21 {strides = array<i32>} : memref<1x8x128xf32, #tpu.memory_space<vmem>>, vector<1x8x128xf32>,
    } else {
    }
    return
  }
  func.func @transform_0(%arg0: i32, %arg1: i32, %arg2: i32) -> (i32, i32, i32) {
    %c0_i32 = arith.constant 0 : i32
    %c0_i32_0 = arith.constant 0 : i32
    return %arg0, %c0_i32, %arg2 : i32, i32, i32
  }
  func.func @transform_1(%arg0: i32, %arg1: i32, %arg2: i32) -> (i32, i32, i32) {
    %c0_i32 = arith.constant 0 : i32
    return %arg0, %arg2, %arg1 : i32, i32, i32
  }
  func.func @transform_2(%arg0: i32, %arg1: i32, %arg2: i32) -> (i32, i32, i32) {
    %c0_i32 = arith.constant 0 : i32
    %c0_i32_0 = arith.constant 0 : i32
    return %arg0, %c0_i32, %arg1 : i32, i32, i32
  }
}

</mosaic_0001>

<llo_original>
// kernel: tpu_custom_call.1
$region0: #{tpu_custom_call.1}
  #allocation0 [shape = 'u32[]', space=smem, size = 0x4, offset = 0x4, fixed_abs, tag = 'smem constant byte address 0x4 - core index']
  #allocation1 [shape = 'u32[72,128]{1,0:T(1,128)}', space=vmem, size = 0x9000, scoped, tag = 'internal scratch']
  #allocation2 [shape = 'f32[1,8,128]{2,1,0:T(8,128)}', space=vmem, size = 0x1000, scoped, tag = 'scratch operand']
  #allocation3 [shape = 'f32[1,8,1]{2,1,0:T(8,128)}', space=vmem, size = 0x1000, scoped, tag = 'scratch operand']
  %s0 = inlined_call_operand.hbm [shape: bf16[2,8,128], index: 0, kind: input, shape index: {}]
  %s1 = inlined_call_operand.hbm [shape: bf16[2,128,128], index: 1, kind: input, shape index: {}]
  %s2 = inlined_call_operand.hbm [shape: f32[2,8,128], index: 2, kind: output, shape index: {}]
  %s3 = sld [smem:[#allocation0]]
  $region57: #{tpu_custom_call.1} parent=0
    _
  %s5 = ssub.s32 1, %s3
  %s6 = scalar_select 0, %s5, %s3
  $region1: #{tpu_custom_call.1} parent=0
    #allocation4 [shape = 'u8[4096]{0}', space=vmem, size = 0x1000, scoped, tag = 'input window, operand 0']
    #allocation5 [shape = 's32[2]{0}', space=sflag, size = 0x8, scoped, tag = 'scoped memory for tpu_custom_call.1']
    #allocation6 [shape = 's32[2]{0}', space=sflag, size = 0x8, scoped, tag = 'scoped memory for tpu_custom_call.1']
    #allocation7 [shape = 'u8[65536]{0}', space=vmem, size = 0x10000, scoped, tag = 'input window, operand 1']
    #allocation8 [shape = 's32[2]{0}', space=sflag, size = 0x8, scoped, tag = 'scoped memory for tpu_custom_call.1']
    #allocation9 [shape = 'u8[8192]{0}', space=vmem, size = 0x2000, scoped, tag = 'output window, operand 0']
    %7 = vsyncpa [#allocation5], 0
    %s8 = scalar_lea.sflag [#allocation5], 1
    %9 = vsyncpa %s8, 0
    %10 = vsyncpa [#allocation8], 0
    %s11 = scalar_lea.sflag [#allocation8], 1
    %12 = vsyncpa %s11, 0
    %13 = vsyncpa [#allocation6], 0
    %s14 = scalar_lea.sflag [#allocation6], 1
    %15 = vsyncpa %s14, 0
    loop: start=0, step=1, limit=4
    $region2: #{tpu_custom_call.1} parent=1 // loop_pre_header
      _
    $region3: #{tpu_custom_call.1} parent=1 // loop_header
      %s17 = sphi 0, %s21
      %p18 = scmp.ge.s32.totalorder %s17, 4
      %s24 = sphi 0, %s43
      %s25 = sphi 0, %s39
      %s26 = sphi 0, %s35
      %s27 = sphi 0, %s24
      %s28 = sphi 0, %s25
      %s29 = sphi 0, %s26
      %s30 = sphi 0, %s27
      %s31 = sphi 0, %s28
      %s32 = sphi 0, %s29
      %s48 = sphi 0, %s50
      %s51 = sphi 0, %s48
      %s52 = sphi 0, %s51
      %s68 = sphi 0, %s52
      %s78 = sphi 0, %s80
      %s81 = sphi 0, %s78
      %s82 = sphi 0, %s81
      %s98 = sphi 0, %s82
      %s106 = sphi 0, %s108
      %s109 = sphi 0, %s106
      %s110 = sphi 0, %s109
      %s126 = sphi 0, %s110
    $region4: #{tpu_custom_call.1} parent=1 // loop_header_branch
      %20 = sbr.rel (%p18) target = $region8
    $region5: #{tpu_custom_call.1} parent=1 // loop_body
      %s22 = ssub.s32 %s17, 1
      %s23 = ssub.s32 %s17, 2
      %s33 = sadd.s32 1, %s26
      %p34 = scmp.ge.s32.totalorder %s33, 1
      %s35 = scalar_select %p34, 0, %s33
      %s36 = sadd.s32 1, %s25
      %s37 = scalar_select %p34, %s36, %s25
      %p38 = scmp.ge.s32.totalorder %s37, 1
      %s39 = scalar_select %p38, 0, %s37
      %s40 = sadd.s32 1, %s24
      %s41 = scalar_select %p38, %s40, %s24
      %p42 = scmp.ge.s32.totalorder %s41, 2
      %s43 = scalar_select %p42, 0, %s41
      %s44 = ssub.s32 %s24, %s43
      %s45 = ssub.s32 %s26, %s35
      %s46 = sor.u32 %s44, %s45
      %p47 = scmp.eq.s32.totalorder %s46, 0
      %s49 = sadd.s32 %s48, 1
      %s50 = scalar_select %p47, %s48, %s49
      %p53 = pneg %p47
      %p54 = scmp.eq.s32.totalorder %s17, 1
      %p55 = por %p53, %p54
      %p56 = scmp.ne.s32.totalorder %s48, %s51
      %p57 = scmp.eq.s32.totalorder %s17, 0
      %p58 = por %p56, %p57
      %p59 = scmp.ne.s32.totalorder %s48, %s51
      %p60 = scmp.eq.s32.totalorder %s22, 1
      %p61 = por %p59, %p60
      %p62 = scmp.ne.s32.totalorder %s51, %s52
      %p63 = scmp.eq.s32.totalorder %s22, 0
      %p64 = por %p62, %p63
      %p65 = scmp.ne.s32.totalorder %s51, %s52
      %p66 = scmp.eq.s32.totalorder %s23, 1
      %p67 = por %p65, %p66
      %p69 = scmp.ne.s32.totalorder %s52, %s68
      %p70 = scmp.eq.s32.totalorder %s23, 0
      %p71 = por %p69, %p70
      %s72 = ssub.s32 %s24, %s43
      %s73 = ssub.s32 %s26, %s35
      %s74 = sor.u32 %s72, %s73
      %s75 = ssub.s32 %s25, %s39
      %s76 = sor.u32 %s74, %s75
      %p77 = scmp.eq.s32.totalorder %s76, 0
      %s79 = sadd.s32 %s78, 1
      %s80 = scalar_select %p77, %s78, %s79
      %p83 = pneg %p77
      %p84 = scmp.eq.s32.totalorder %s17, 1
      %p85 = por %p83, %p84
      %p86 = scmp.ne.s32.totalorder %s78, %s81
      %p87 = scmp.eq.s32.totalorder %s17, 0
      %p88 = por %p86, %p87
      %p89 = scmp.ne.s32.totalorder %s78, %s81
      %p90 = scmp.eq.s32.totalorder %s22, 1
      %p91 = por %p89, %p90
      %p92 = scmp.ne.s32.totalorder %s81, %s82
      %p93 = scmp.eq.s32.totalorder %s22, 0
      %p94 = por %p92, %p93
      %p95 = scmp.ne.s32.totalorder %s81, %s82
      %p96 = scmp.eq.s32.totalorder %s23, 1
      %p97 = por %p95, %p96
      %p99 = scmp.ne.s32.totalorder %s82, %s98
      %p100 = scmp.eq.s32.totalorder %s23, 0
      %p101 = por %p99, %p100
      %s102 = ssub.s32 %s24, %s43
      %s103 = ssub.s32 %s25, %s39
      %s104 = sor.u32 %s102, %s103
      %p105 = scmp.eq.s32.totalorder %s104, 0
      %s107 = sadd.s32 %s106, 1
      %s108 = scalar_select %p105, %s106, %s107
      %p111 = pneg %p105
      %p112 = scmp.eq.s32.totalorder %s17, 1
      %p113 = por %p111, %p112
      %p114 = scmp.ne.s32.totalorder %s106, %s109
      %p115 = scmp.eq.s32.totalorder %s17, 0
      %p116 = por %p114, %p115
      %p117 = scmp.ne.s32.totalorder %s106, %s109
      %p118 = scmp.eq.s32.totalorder %s22, 1
      %p119 = por %p117, %p118
      %p120 = scmp.ne.s32.totalorder %s109, %s110
      %p121 = scmp.eq.s32.totalorder %s22, 0
      %p122 = por %p120, %p121
      %p123 = scmp.ne.s32.totalorder %s109, %s110
      %p124 = scmp.eq.s32.totalorder %s23, 1
      %p125 = por %p123, %p124
      %p127 = scmp.ne.s32.totalorder %s110, %s126
      %p128 = scmp.eq.s32.totalorder %s23, 0
      %p129 = por %p127, %p128
      %p130 = scmp.le.s32.totalorder 1, %s17
      %p131 = scmp.lt.s32.totalorder %s17, 3
      %p132 = pnand %p130, %p131
      %p133 = pneg %p132
      // Predicated region
      $region9: #{tpu_custom_call.1} parent=5 // pred_check
        _
      $region10: #{tpu_custom_call.1} parent=5 // pred_check_branch
        %135 = sbr.rel (%p132) target = $region12
      $region11: #{tpu_custom_call.1} parent=5 // pred_region
        %s136 = ssub.s32 %s17, 1
      $region12: #{tpu_custom_call.1} parent=5 // pred_fallthru
        _
      %p137 = scmp.lt.s32.totalorder %s17, 2
      // Predicated region
      $region13: #{tpu_custom_call.1} parent=5 // pred_check
        %p138 = pneg %p137
      $region14: #{tpu_custom_call.1} parent=5 // pred_check_branch
        %140 = sbr.rel (%p138) target = $region16
      $region15: #{tpu_custom_call.1} parent=5 // pred_region
        // Predicated region
        $region17: #{tpu_custom_call.1} parent=15 // pred_check
          %p141 = pneg %p58
        $region18: #{tpu_custom_call.1} parent=15 // pred_check_branch
          %143 = sbr.rel (%p141) target = $region20
        $region19: #{tpu_custom_call.1} parent=15 // pred_region
          %s144 = sand.u32 %s48, 1
          %s145 = scalar_lea.sflag [#allocation5], %s144
          %s146 = sand.u32 %s48, 1
          %s147 = smul.addr %s146, 4
          %s148 = scalar_lea.vmem [#allocation4], %s147
          %150 = vsyncadd %s145, 0
          %s151 = sadd.s32 %s26, %s24
          %s152 = smul.addr %s151, 4
          %s153 = scalar_lea.hbm %s0, %s152
          %s155 = sshll.u32 %s153, 4
          %s156 = int_to_ptr.hbm [resolvable:$true] %s155
          %s157 = sshll.u32 %s148, 4
          %s158 = int_to_ptr.vmem [resolvable:$true] %s157
          %160 = dma.hbm_to_vmem [thread:$0]  %s156, 64, %s158, %s145
        $region20: #{tpu_custom_call.1} parent=15 // pred_fallthru
          _
        // Predicated region
        $region21: #{tpu_custom_call.1} parent=15 // pred_check
          %p161 = pneg %p88
        $region22: #{tpu_custom_call.1} parent=15 // pred_check_branch
          %163 = sbr.rel (%p161) target = $region24
        $region23: #{tpu_custom_call.1} parent=15 // pred_region
          %s164 = sand.u32 %s78, 1
          %s165 = scalar_lea.sflag [#allocation8], %s164
          %s166 = sand.u32 %s78, 1
          %s167 = smul.addr %s166, 64
          %s168 = scalar_lea.vmem [#allocation7], %s167
          %s169 = smul.u32 16, %s26
          %171 = vsyncadd %s165, 0
          %s172 = sadd.s32 %s25, %s169
          %s173 = smul.addr %s24, 16
          %s174 = sadd.s32 %s172, %s173
          %s175 = smul.addr %s174, 4
          %s176 = scalar_lea.hbm %s1, %s175
          %s177 = sshll.u32 %s176, 4
          %s178 = int_to_ptr.hbm [resolvable:$true] %s177
          %s179 = sshll.u32 %s168, 4
          %s180 = int_to_ptr.vmem [resolvable:$true] %s179
          %185 = dma.hbm_to_vmem [thread:$0]  %s178, 1024, %s180, %s165, 64, 64, 4
        $region24: #{tpu_custom_call.1} parent=15 // pred_fallthru
          _
      $region16: #{tpu_custom_call.1} parent=5 // pred_fallthru
        _
      %p186 = scmp.le.s32.totalorder 1, %s17
      %p187 = scmp.lt.s32.totalorder %s17, 3
      %p188 = pnand %p186, %p187
      %p189 = pneg %p188
      // Predicated region
      $region25: #{tpu_custom_call.1} parent=5 // pred_check
        _
      $region26: #{tpu_custom_call.1} parent=5 // pred_check_branch
        %191 = sbr.rel (%p188) target = $region28
      $region27: #{tpu_custom_call.1} parent=5 // pred_region
        %s192 = ssub.s32 %s17, 1
        %s193 = sand.u32 %s51, 1
        %s194 = scalar_lea.sflag [#allocation5], %s193
        %s195 = sand.u32 %s51, 1
        %s196 = smul.addr %s195, 4
        %s197 = scalar_lea.vmem [#allocation4], %s196
        // Predicated region
        $region29: #{tpu_custom_call.1} parent=27 // pred_check
          %p198 = pneg %p64
        $region30: #{tpu_custom_call.1} parent=27 // pred_check_branch
          %200 = sbr.rel (%p198) target = $region32
        $region31: #{tpu_custom_call.1} parent=27 // pred_region
          %202 = dma.done %s194, 64
        $region32: #{tpu_custom_call.1} parent=27 // pred_fallthru
          _
        %s203 = sand.u32 %s81, 1
        %s204 = scalar_lea.sflag [#allocation8], %s203
        %s205 = sand.u32 %s81, 1
        %s206 = smul.addr %s205, 64
        %s207 = scalar_lea.vmem [#allocation7], %s206
        // Predicated region
        $region33: #{tpu_custom_call.1} parent=27 // pred_check
          %p208 = pneg %p94
        $region34: #{tpu_custom_call.1} parent=27 // pred_check_branch
          %210 = sbr.rel (%p208) target = $region36
        $region35: #{tpu_custom_call.1} parent=27 // pred_region
          %212 = dma.done %s204, 1024
        $region36: #{tpu_custom_call.1} parent=27 // pred_fallthru
          _
        %s213 = sand.u32 %s51, 1
        %s214 = scalar_lea.sflag [#allocation5], %s213
        %s215 = sand.u32 %s51, 1
        %s216 = smul.addr %s215, 4
        %s217 = scalar_lea.vmem [#allocation4], %s216
        %p218 = pneg %p64
        %p219 = pneg %p61
        %s220 = sand.u32 %s81, 1
        %s221 = scalar_lea.sflag [#allocation8], %s220
        %s222 = sand.u32 %s81, 1
        %s223 = smul.addr %s222, 64
        %s224 = scalar_lea.vmem [#allocation7], %s223
        %p225 = pneg %p94
        %p226 = pneg %p91
        %p227 = pneg %p122
        %p228 = pneg %p119
        %s229 = sand.u32 %s109, 1
        %s230 = scalar_lea.sflag [#allocation6], %s229
        %s231 = sand.u32 %s109, 1
        %s232 = smul.addr %s231, 8
        %s233 = scalar_lea.vmem [#allocation9], %s232
        %s234 = smul.u32 16, %s29
        %p235 = scmp.eq.s32.totalorder %s29, 0
        // Predicated region
        $region37: #{tpu_custom_call.1} parent=27 // pred_check
          %p236 = pneg %p235
        $region38: #{tpu_custom_call.1} parent=27 // pred_check_branch
          %238 = sbr.rel (%p236) target = $region40
        $region39: #{tpu_custom_call.1} parent=27 // pred_region
          %239 = vst [vmem:[#allocation2] sm:$0xff] 0.0
          %vm240 = vcmask 7168
          %241 = vst.msk [vmem:[#allocation3] sm:$0xff] %vm240, 0.0
        $region40: #{tpu_custom_call.1} parent=27 // pred_fallthru
          _
        %v242 = vld [vmem:[%s197] sm:$0xf]
        %v243 = vld [vmem:[%s207] sm:$0xf]
        %v244 = vld [vmem:[%s207 + $0x4] sm:$0xf]
        %v245 = vld [vmem:[%s207 + $0x8] sm:$0xf]
        %v246 = vld [vmem:[%s207 + $0xc] sm:$0xf]
        %v247 = vld [vmem:[%s207 + $0x10] sm:$0xf]
        %v248 = vld [vmem:[%s207 + $0x14] sm:$0xf]
        %v249 = vld [vmem:[%s207 + $0x18] sm:$0xf]
        %v250 = vld [vmem:[%s207 + $0x1c] sm:$0xf]
        %v251 = vld [vmem:[%s207 + $0x20] sm:$0xf]
        %v252 = vld [vmem:[%s207 + $0x24] sm:$0xf]
        %v253 = vld [vmem:[%s207 + $0x28] sm:$0xf]
        %v254 = vld [vmem:[%s207 + $0x2c] sm:$0xf]
        %v255 = vld [vmem:[%s207 + $0x30] sm:$0xf]
        %v256 = vld [vmem:[%s207 + $0x34] sm:$0xf]
        %v257 = vld [vmem:[%s207 + $0x38] sm:$0xf]
        %v258 = vld [vmem:[%s207 + $0x3c] sm:$0xf]
        %v259 = vld [vmem:[#allocation2] sm:$0xff]
        %v276 = vunpack.c.l.b16 %v243
        %v277 = vunpack.c.l.b16 %v244
        %v278 = vunpack.c.l.b16 %v245
        %v279 = vunpack.c.l.b16 %v246
        %v280 = vunpack.c.l.b16 %v247
        %v281 = vunpack.c.l.b16 %v248
        %v282 = vunpack.c.l.b16 %v249
        %v283 = vunpack.c.l.b16 %v250
        %v284 = vunpack.c.l.b16 %v251
        %v285 = vunpack.c.l.b16 %v252
        %v286 = vunpack.c.l.b16 %v253
        %v287 = vunpack.c.l.b16 %v254
        %v288 = vunpack.c.l.b16 %v255
        %v289 = vunpack.c.l.b16 %v256
        %v290 = vunpack.c.l.b16 %v257
        %v291 = vunpack.c.l.b16 %v258
        %v292 = vpack.c.b16 %v277, %v276
        %v293 = vpack.c.b16 %v279, %v278
        %v294 = vpack.c.b16 %v281, %v280
        %v295 = vpack.c.b16 %v283, %v282
        %v296 = vpack.c.b16 %v285, %v284
        %v297 = vpack.c.b16 %v287, %v286
        %v298 = vpack.c.b16 %v289, %v288
        %v299 = vpack.c.b16 %v291, %v290
        %308 = vmatpush.bf16.msra.mxu0 %v299
        %309 = vmatpush.bf16.msra.mxu0 %v298
        %310 = vmatpush.bf16.msra.mxu0 %v297
        %311 = vmatpush.bf16.msra.mxu0 %v296
        %312 = vmatpush.bf16.msra.mxu0 %v295
        %313 = vmatpush.bf16.msra.mxu0 %v294
        %314 = vmatpush.bf16.msra.mxu0 %v293
        %315 = vmatpush.bf16.msra.mxu0 %v292
        %316 = vmatmul.bf16.gmra.mxu0 %v242
        %v317 = vpop.f32.mrf.mxu0
        %v318 = vadd.f32 0.0, %v317
        %v319 = vpop.f32.mrf.mxu0
        %320 = vdwg.mxu0
        %v321 = vadd.f32 %v259, %v318
        %322 = vst [vmem:[#allocation2] sm:$0xff] %v321
        %v323 = vld [vmem:[#allocation3] sm:$0xff]
        %v324 = vunpack.c.l.bf16 %v242
        %325 = vadd.xlane.f32.xlu0 %v324
        %v326 = vpop.xlane.xlu0 %325
        %v327 = vadd.f32 %v323, %v326
        %vm328 = vcmask 7168
        %329 = vst.msk [vmem:[#allocation3] sm:$0xff] %vm328, %v327
        // Predicated region
        $region41: #{tpu_custom_call.1} parent=27 // pred_check
          %p330 = pneg %p235
        $region42: #{tpu_custom_call.1} parent=27 // pred_check_branch
          %332 = sbr.rel (%p330) target = $region44
        $region43: #{tpu_custom_call.1} parent=27 // pred_region
          %v333 = vld [vmem:[#allocation2] sm:$0xff]
          %v334 = vld [vmem:[#allocation3] sm:$0xff]
          %336 = vset.pattern.permute.xlu0 0
          %337 = vperm.xlu0 %336, %v334
          %v338 = vpop.permute.xlu0 %337
          %v340 = vrcp.pop %v338
          %v341 = vmul.f32 %v338, %v340
          %v342 = vsub.f32 1.0, %v341
          %v343 = vmul.f32 %v340, %v342
          %v344 = vadd.f32 %v340, %v343
          %vm345 = vweird.f32 %v338
          %vm346 = vweird.f32 %v340
          %vm347 = vmor %vm345, %vm346
          %v348 = vsel %vm347, %v340, %v344
          %v349 = vand.u32 2147483647, %v338
          %vm350 = vcmp.eq.f32.partialorder %v349, 8.507059e+37
          %v351 = vand.u32 %v338, 2147483648
          %v352 = vor.u32 1.1754944e-38, %v351
          %v353 = vsel %vm350, %v352, %v348
          %v354 = vmul.f32 %v333, %v353
          %355 = vst [vmem:[%s233] sm:$0xff] %v354
        $region44: #{tpu_custom_call.1} parent=27 // pred_fallthru
          _
        %s356 = sand.u32 %s109, 1
        %s357 = scalar_lea.sflag [#allocation6], %s356
        %s358 = sand.u32 %s109, 1
        %s359 = smul.addr %s358, 8
        %s360 = scalar_lea.vmem [#allocation9], %s359
        // Predicated region
        $region45: #{tpu_custom_call.1} parent=27 // pred_check
          %p361 = pneg %p119
        $region46: #{tpu_custom_call.1} parent=27 // pred_check_branch
          %363 = sbr.rel (%p361) target = $region48
        $region47: #{tpu_custom_call.1} parent=27 // pred_region
          %365 = vsyncadd %s357, 0
          %s366 = sadd.s32 %s28, %s27
          %s367 = smul.addr %s366, 8
          %s368 = scalar_lea.hbm %s2, %s367
          %s370 = sshll.u32 %s360, 4
          %s371 = int_to_ptr.vmem [resolvable:$true] %s370
          %s372 = sshll.u32 %s368, 4
          %s373 = int_to_ptr.hbm [resolvable:$true] %s372
          %375 = dma.vmem_to_hbm [thread:$0]  %s371, 128, %s373, %s357
        $region48: #{tpu_custom_call.1} parent=27 // pred_fallthru
          _
      $region28: #{tpu_custom_call.1} parent=5 // pred_fallthru
        _
      %p376 = scmp.le.s32.totalorder 2, %s17
      // Predicated region
      $region49: #{tpu_custom_call.1} parent=5 // pred_check
        %p377 = pneg %p376
      $region50: #{tpu_custom_call.1} parent=5 // pred_check_branch
        %379 = sbr.rel (%p377) target = $region52
      $region51: #{tpu_custom_call.1} parent=5 // pred_region
        %s380 = ssub.s32 %s17, 2
        // Predicated region
        $region53: #{tpu_custom_call.1} parent=51 // pred_check
          %p381 = pneg %p125
        $region54: #{tpu_custom_call.1} parent=51 // pred_check_branch
          %383 = sbr.rel (%p381) target = $region56
        $region55: #{tpu_custom_call.1} parent=51 // pred_region
          %s384 = sand.u32 %s110, 1
          %s385 = scalar_lea.sflag [#allocation6], %s384
          %s386 = sand.u32 %s110, 1
          %s387 = smul.addr %s386, 8
          %s388 = scalar_lea.vmem [#allocation9], %s387
          %390 = dma.done %s385, 128
        $region56: #{tpu_custom_call.1} parent=51 // pred_fallthru
          _
      $region52: #{tpu_custom_call.1} parent=5 // pred_fallthru
        _
    $region6: #{tpu_custom_call.1} parent=1 // loop_footer
      %s21 = sadd.s32 1, %s17
    $region7: #{tpu_custom_call.1} parent=1 // loop_footer_branch
      %16 = sbr.rel target = $region3
    $region8: #{tpu_custom_call.1} parent=1 // loop_exit
      _
    %391 = vsyncpa [#allocation5], 1
    %s392 = scalar_lea.sflag [#allocation5], 1
    %393 = vsyncpa %s392, 1
    %394 = vsyncpa [#allocation8], 1
    %s395 = scalar_lea.sflag [#allocation8], 1
    %396 = vsyncpa %s395, 1
    %397 = vsyncpa [#allocation6], 1
    %s398 = scalar_lea.sflag [#allocation6], 1
    %399 = vsyncpa %s398, 1

</llo_original>
